<compile_context>
chip_gen: v6e
topology: v6e:2x2x1
jax: 0.10.0
libtpu: 0.0.40
codegen_flags: <defaults>
</compile_context>

<pallas_src>
import functools

import jax
import jax.numpy as jnp
from jax.experimental import pallas as pl
from jax.experimental.pallas import tpu as pltpu

_LANES = 128
_SUBLANES = 8
_ROW_ALIGN = 16        # multiple of 16 keeps bf16 sublane packing dense
_MAX_TILE_ROWS = 2048  # ~23 MiB double-buffered at f32 -> fits every gen with
                       # the explicit vmem_limit below (v7x physical = 64 MiB)


def _round_up(x, m):
    return ((x + m - 1) // m) * m


def _cdiv(a, b):
    return -(-a // b)


def _as_supported(x):
    # keep narrow floats narrow (review item); anything else -> f32
    if x.dtype.name in ("bfloat16", "float16", "float32"):
        return x
    return x.astype(jnp.float32)


def _probiou_kernel(pred_ref, targ_ref, wmean_ref, out_ref, *, eps, mode):
    # pred_ref / targ_ref : [5, TR, 128]  channel-first (x, y, w, h, angle)
    # wmean_ref           : [TR, 128]     precomputed weight.mean(1), f32
    # out_ref             : [1, 8, 128]   per-tile partial sums (lane dense)
    f32 = jnp.float32
    # Per-channel loads; upcast AFTER the DMA so HBM traffic stays at the
    # producer dtype and the VPU does the widening for free.
    x1 = pred_ref[0].astype(f32)
    y1 = pred_ref[1].astype(f32)
    w1 = pred_ref[2].astype(f32)
    h1 = pred_ref[3].astype(f32)
    ang1 = pred_ref[4].astype(f32)

    x2 = targ_ref[0].astype(f32)
    y2 = targ_ref[1].astype(f32)
    w2 = targ_ref[2].astype(f32)
    h2 = targ_ref[3].astype(f32)
    ang2 = targ_ref[4].astype(f32)

    a1_ = jnp.square(w1) * (1.0 / 12.0)
    b1_ = jnp.square(h1) * (1.0 / 12.0)
    a2_ = jnp.square(w2) * (1.0 / 12.0)
    b2_ = jnp.square(h2) * (1.0 / 12.0)

    def rotated_form(a_, b_, ang):
        ca, sa = jnp.cos(ang), jnp.sin(ang)
        ca2, sa2 = jnp.square(ca), jnp.square(sa)
        return (a_ * ca2 + b_ * sa2, a_ * sa2 + b_ * ca2, (a_ - b_) * ca * sa)

    a1, b1, c1 = rotated_form(a1_, b1_, ang1)
    a2, b2, c2 = rotated_form(a2_, b2_, ang2)

    ab_a = a1 + a2
    ab_b = b1 + b2
    c_s = c1 + c2

    # dx/dy computed once and reused; the (x2 - x1) sign of the reference is
    # folded into the cross term (exact negation -> bit-identical rounding).
    dx = x1 - x2
    dy = y1 - y2

    t1 = 0.25 * (ab_a * jnp.square(dy) + ab_b * jnp.square(dx)) - 0.5 * (c_s * dx * dy)
    t2 = ab_a * ab_b - jnp.square(c_s)
    t3_ = (a1 * b1 - c1 * c1) * (a2 * b2 - c2 * c2)
    denom = 4.0 * jnp.sqrt(jnp.maximum(t3_, 0.0)) + eps

    # Exact divides (no approx reciprocal): this path feeds B_d directly and
    # the kernel is memory-bound, so the extra VALU ops are hidden anyway.
    t3 = 0.5 * jnp.log(t2 / denom)
    B_d = jnp.clip(t1 / t2 + t3, eps, 100.0)

    if mode == 'l1':
        probiou = jnp.sqrt(1.0 - jnp.exp(-B_d) + eps)
    elif mode == 'l2':
        # -log(1 - (sqrt(1 - exp(-B_d) + eps))**2 + eps) == B_d algebraically;
        # skip the dead exp/log round trip (EUP relief, esp. on v5e).
        probiou = B_d
    else:
        raise ValueError(f"unknown mode {mode!r}")

    part = probiou * wmean_ref[...]                      # [TR, 128]
    tr = part.shape[0]
    out_ref[...] = jnp.sum(
        part.reshape(tr // _SUBLANES, _SUBLANES, _LANES),
        axis=0, keepdims=True)                           # [1, 8, 128]


class ProbiouLoss:
    def __init__(self, mode='l1', eps=0.001, loss_weight=1.0):
        assert mode in ('l1', 'l2')
        self.mode = mode
        self.eps = eps
        self.loss_weight = loss_weight

    def __call__(self, loc_p, loc_t, weight, avg_factor=None):
        if avg_factor is None:
            avg_factor = 1.0

        loc_p = _as_supported(loc_p)
        loc_t = _as_supported(loc_t)
        n = loc_p.shape[0]

        # weight.mean(1) precomputed outside the kernel (fuses into the
        # surrounding XLA graph, cuts weight traffic by K and removes the
        # in-kernel cross-lane reduce).  Kept f32 for accumulation accuracy:
        # it is only ~1/10 of the box-slab traffic.
        w_mean = jnp.mean(weight.astype(jnp.float32), axis=1)        # [N]

        # ---- tiling decisions -------------------------------------------
        n_rows = _cdiv(max(n, 1), _LANES)                 # cdiv(N, 128)
        # Keep >= 2 tiles when there is enough work so the "parallel" grid
        # axis can split across v7x's two TensorCores, and cap the tile so
        # the double-buffered working set stays inside VMEM on every gen.
        tr = max(_ROW_ALIGN,
                 min(_MAX_TILE_ROWS, _round_up(_cdiv(n_rows, 2), _ROW_ALIGN)))
        n_rows_pad = _round_up(n_rows, tr)
        n_pad = n_rows_pad * _LANES
        grid_n = n_rows_pad // tr

        # ---- padding + channel-first relayout ---------------------------
        # Padded boxes are all-ones (finite intermediates, t2 > 0); padded
        # weight is 0 -> padded lanes contribute exactly zero to the sum.
        # TODO(synk): producer should emit [5, N] channel-first boxes so this
        # extra HBM pass disappears entirely.
        def to_slabs(boxes):
            slab = jnp.pad(boxes.T, ((0, 0), (0, n_pad - n)),
                           constant_values=1.0)
            return slab.reshape(5, n_rows_pad, _LANES)

        pred3 = to_slabs(loc_p)                           # keeps input dtype
        targ3 = to_slabs(loc_t)
        wm2 = jnp.pad(w_mean, ((0, n_pad - n),)).reshape(n_rows_pad, _LANES)

        kernel = functools.partial(_probiou_kernel, eps=self.eps, mode=self.mode)

        box_bytes = 5 * tr * _LANES * (pred3.dtype.itemsize
                                       + targ3.dtype.itemsize)
        blk_bytes = box_bytes + tr * _LANES * 4 + _SUBLANES * _LANES * 4
        # Double-buffered working set + headroom; explicit so TR=2048 also
        # fits under v5e's smaller default scoped-VMEM limit.
        vmem_limit = int(min(max(2 * blk_bytes + (4 << 20), 16 << 20), 56 << 20))

        cost = pl.CostEstimate(
            flops=int(70 * n_pad),
            transcendentals=int(8 * n_pad),
            bytes_accessed=int(blk_bytes * grid_n),
        )

        partials = pl.pallas_call(
            kernel,
            out_shape=jax.ShapeDtypeStruct((grid_n, _SUBLANES, _LANES),
                                           jnp.float32),
            grid=(grid_n,),
            in_specs=[
                pl.BlockSpec((5, tr, _LANES), lambda i: (0, i, 0)),
                pl.BlockSpec((5, tr, _LANES), lambda i: (0, i, 0)),
                pl.BlockSpec((tr, _LANES), lambda i: (i, 0)),
            ],
            out_specs=pl.BlockSpec((1, _SUBLANES, _LANES), lambda i: (i, 0, 0)),
            compiler_params=pltpu.CompilerParams(
                dimension_semantics=("parallel",),
                vmem_limit_bytes=vmem_limit),
            cost_estimate=cost,
        )(pred3, targ3, wm2)

        total = jnp.sum(partials)
        # Scalar glue: torch.sum(...)[None] * loss_weight / avg_factor
        return (self.loss_weight * total / avg_factor)[None]


def _reference(loc_p, loc_t, weight, mode='l1', eps=0.001,
               loss_weight=1.0, avg_factor=1.0):
    """Pure-JAX reference mirroring the PyTorch code op-for-op."""
    loc_p = loc_p.astype(jnp.float32)
    loc_t = loc_t.astype(jnp.float32)
    weight = weight.astype(jnp.float32)

    def gbb_form(b):
        return jnp.concatenate(
            [b[:, :2], jnp.square(b[:, 2:4]) / 12.0, b[:, 4:]], axis=1)

    def rotated_form(a_, b_, ang):
        ca, sa = jnp.cos(ang), jnp.sin(ang)
        return (a_ * ca**2 + b_ * sa**2,
                a_ * sa**2 + b_ * ca**2,
                (a_ - b_) * ca * sa)

    g1, g2 = gbb_form(loc_p), gbb_form(loc_t)
    x1, y1, a1_, b1_, c1_ = (g1[:, 0], g1[:, 1], g1[:, 2], g1[:, 3], g1[:, 4])
    x2, y2, a2_, b2_, c2_ = (g2[:, 0], g2[:, 1], g2[:, 2], g2[:, 3], g2[:, 4])
    a1, b1, c1 = rotated_form(a1_, b1_, c1_)
    a2, b2, c2 = rotated_form(a2_, b2_, c2_)
    t1 = 0.25 * ((a1 + a2) * (y1 - y2)**2 + (b1 + b2) * (x1 - x2)**2) \
         + 0.5 * ((c1 + c2) * (x2 - x1) * (y1 - y2))
    t2 = (a1 + a2) * (b1 + b2) - (c1 + c2)**2
    t3_ = (a1 * b1 - c1 * c1) * (a2 * b2 - c2 * c2)
    t3 = 0.5 * jnp.log(t2 / (4 * jnp.sqrt(jnp.maximum(t3_, 0.0)) + eps))
    B_d = jnp.clip(t1 / t2 + t3, eps, 100.0)
    l1 = jnp.sqrt(1.0 - jnp.exp(-B_d) + eps)
    l2 = -jnp.log(1.0 - l1**2 + eps)
    probiou = l1 if mode == 'l1' else l2
    return (loss_weight * jnp.sum(probiou * weight.mean(1)) / avg_factor)[None]


def _make_boxes(key, n):
    # Moderately-overlapping boxes: centers in [0,2], sizes in [4,6], angle in
    # [-1,1].  This is the operating regime of the loss and keeps B_d small
    # and well conditioned for the l1/l2 comparisons below.
    k1, k2, k3 = jax.random.split(key, 3)
    xy = jax.random.uniform(k1, (n, 2), jnp.float32, 0.0, 2.0)
    wh = jax.random.uniform(k2, (n, 2), jnp.float32, 4.0, 6.0)
    an = jax.random.uniform(k3, (n, 1), jnp.float32, -1.0, 1.0)
    return jnp.concatenate([xy, wh, an], axis=1)


if __name__ == "__main__":
    key = jax.random.PRNGKey(0)
    kp, kt, kw, kp2, kt2, kw2 = jax.random.split(key, 6)

    # --- small shapes: N=333 boxes (non-multiple of 128 -> exercises padding)
    N, K = 333, 4
    loc_p = _make_boxes(kp, N)
    loc_t = _make_boxes(kt, N)
    weight = jax.random.uniform(kw, (N, K), jnp.float32, 0.0, 1.0)

    # mode='l1', default avg_factor
    loss_l1 = ProbiouLoss(mode='l1', eps=0.001, loss_weight=1.0)
    out1 = jax.block_until_ready(loss_l1(loc_p, loc_t, weight, avg_factor=None))
    ref1 = _reference(loc_p, loc_t, weight, mode='l1')
    assert out1.shape == (1,)
    assert jnp.allclose(out1, ref1, rtol=1e-3, atol=1e-4), (out1, ref1)

    # mode='l2', explicit avg_factor / loss_weight
    loss_l2 = ProbiouLoss(mode='l2', eps=0.001, loss_weight=2.0)
    out2 = jax.block_until_ready(loss_l2(loc_p, loc_t, weight, avg_factor=4.0))
    ref2 = _reference(loc_p, loc_t, weight, mode='l2',
                      loss_weight=2.0, avg_factor=4.0)
    assert out2.shape == (1,)
    assert jnp.allclose(out2, ref2, rtol=1e-3, atol=1e-4), (out2, ref2)

    # bf16 boxes stay narrow through the relayout/DMA and are upcast in-kernel
    loc_p_bf = loc_p.astype(jnp.bfloat16)
    loc_t_bf = loc_t.astype(jnp.bfloat16)
    out3 = jax.block_until_ready(loss_l1(loc_p_bf, loc_t_bf, weight))
    ref3 = _reference(loc_p_bf.astype(jnp.float32),
                      loc_t_bf.astype(jnp.float32), weight, mode='l1')
    assert out3.shape == (1,)
    assert jnp.allclose(out3, ref3, rtol=1e-3, atol=1e-4), (out3, ref3)

    # --- larger N to exercise grid_n >= 2 (multi-tile partials path)
    N2, K2 = 5000, 3
    loc_p2 = _make_boxes(kp2, N2)
    loc_t2 = _make_boxes(kt2, N2)
    weight2 = jax.random.uniform(kw2, (N2, K2), jnp.float32, 0.0, 1.0)
    out4 = jax.block_until_ready(
        loss_l1(loc_p2, loc_t2, weight2, avg_factor=float(N2)))
    ref4 = _reference(loc_p2, loc_t2, weight2, mode='l1',
                      avg_factor=float(N2))
    assert out4.shape == (1,)
    assert jnp.allclose(out4, ref4, rtol=1e-3, atol=1e-4), (out4, ref4)

    print("KERNEL_OK")
</pallas_src>

<mosaic_0001>
module attributes {stable_mosaic.version = 11 : i64} {
  func.func @_probiou_kernel(%arg0: i32, %arg1: memref<5x16x128xf32, #tpu.memory_space<vmem>>, %arg2: memref<5x16x128xf32, #tpu.memory_space<vmem>>, %arg3: memref<16x128xf32, #tpu.memory_space<vmem>>, %arg4: memref<1x8x128xf32, #tpu.memory_space<vmem>>) attributes {dimension_semantics = [#tpu.dimension_semantics<parallel>], iteration_bounds = array<i64: 1>, scalar_prefetch = 0 : i64, scratch_operands = 0 : i64, tpu.core_type = #tpu.core_type<tc>, window_params = [{transform_indices = @transform_0, window_bounds = array<i64: 5, 16, 128>}, {transform_indices = @transform_1, window_bounds = array<i64: 5, 16, 128>}, {transform_indices = @transform_2, window_bounds = array<i64: 16, 128>}, {transform_indices = @transform_3, window_bounds = array<i64: 1, 8, 128>}]} {
    %c0 = arith.constant 0 : index
    %c0_0 = arith.constant 0 : index
    %c0_1 = arith.constant 0 : index
    %0 = vector.load %arg1[%c0, %c0_0, %c0_1] : memref<5x16x128xf32, #tpu.memory_space<vmem>>, vector<1x16x128xf32>
    %1 = vector.shape_cast %0 : vector<1x16x128xf32> to vector<16x128xf32>
    %c1 = arith.constant 1 : index
    %c0_2 = arith.constant 0 : index
    %c0_3 = arith.constant 0 : index
    %2 = vector.load %arg1[%c1, %c0_2, %c0_3] : memref<5x16x128xf32, #tpu.memory_space<vmem>>, vector<1x16x128xf32>
    %3 = vector.shape_cast %2 : vector<1x16x128xf32> to vector<16x128xf32>
    %c2 = arith.constant 2 : index
    %c0_4 = arith.constant 0 : index
    %c0_5 = arith.constant 0 : index
    %4 = vector.load %arg1[%c2, %c0_4, %c0_5] : memref<5x16x128xf32, #tpu.memory_space<vmem>>, vector<1x16x128xf32>
    %5 = vector.shape_cast %4 : vector<1x16x128xf32> to vector<16x128xf32>
    %c3 = arith.constant 3 : index
    %c0_6 = arith.constant 0 : index
    %c0_7 = arith.constant 0 : index
    %6 = vector.load %arg1[%c3, %c0_6, %c0_7] : memref<5x16x128xf32, #tpu.memory_space<vmem>>, vector<1x16x128xf32>
    %7 = vector.shape_cast %6 : vector<1x16x128xf32> to vector<16x128xf32>
    %c4 = arith.constant 4 : index
    %c0_8 = arith.constant 0 : index
    %c0_9 = arith.constant 0 : index
    %8 = vector.load %arg1[%c4, %c0_8, %c0_9] : memref<5x16x128xf32, #tpu.memory_space<vmem>>, vector<1x16x128xf32>
    %9 = vector.shape_cast %8 : vector<1x16x128xf32> to vector<16x128xf32>
    %c0_10 = arith.constant 0 : index
    %c0_11 = arith.constant 0 : index
    %c0_12 = arith.constant 0 : index
    %10 = vector.load %arg2[%c0_10, %c0_11, %c0_12] : memref<5x16x128xf32, #tpu.memory_space<vmem>>, vector<1x16x128xf32>
    %11 = vector.shape_cast %10 : vector<1x16x128xf32> to vector<16x128xf32>
    %c1_13 = arith.constant 1 : index
    %c0_14 = arith.constant 0 : index
    %c0_15 = arith.constant 0 : index
    %12 = vector.load %arg2[%c1_13, %c0_14, %c0_15] : memref<5x16x128xf32, #tpu.memory_space<vmem>>, vector<1x16x128xf32>
    %13 = vector.shape_cast %12 : vector<1x16x128xf32> to vector<16x128xf32>
    %c2_16 = arith.constant 2 : index
    %c0_17 = arith.constant 0 : index
    %c0_18 = arith.constant 0 : index
    %14 = vector.load %arg2[%c2_16, %c0_17, %c0_18] : memref<5x16x128xf32, #tpu.memory_space<vmem>>, vector<1x16x128xf32>
    %15 = vector.shape_cast %14 : vector<1x16x128xf32> to vector<16x128xf32>
    %c3_19 = arith.constant 3 : index
    %c0_20 = arith.constant 0 : index
    %c0_21 = arith.constant 0 : index
    %16 = vector.load %arg2[%c3_19, %c0_20, %c0_21] : memref<5x16x128xf32, #tpu.memory_space<vmem>>, vector<1x16x128xf32>
    %17 = vector.shape_cast %16 : vector<1x16x128xf32> to vector<16x128xf32>
    %c4_22 = arith.constant 4 : index
    %c0_23 = arith.constant 0 : index
    %c0_24 = arith.constant 0 : index
    %18 = vector.load %arg2[%c4_22, %c0_23, %c0_24] : memref<5x16x128xf32, #tpu.memory_space<vmem>>, vector<1x16x128xf32>
    %19 = vector.shape_cast %18 : vector<1x16x128xf32> to vector<16x128xf32>
    %20 = arith.mulf %5, %5 : vector<16x128xf32>
    %cst = arith.constant 0.0833333358 : f32
    %21 = vector.broadcast %cst : f32 to vector<16x128xf32>
    %22 = arith.mulf %20, %21 : vector<16x128xf32>
    %23 = arith.mulf %7, %7 : vector<16x128xf32>
    %cst_25 = arith.constant 0.0833333358 : f32
    %24 = vector.broadcast %cst_25 : f32 to vector<16x128xf32>
    %25 = arith.mulf %23, %24 : vector<16x128xf32>
    %26 = arith.mulf %15, %15 : vector<16x128xf32>
    %cst_26 = arith.constant 0.0833333358 : f32
    %27 = vector.broadcast %cst_26 : f32 to vector<16x128xf32>
    %28 = arith.mulf %26, %27 : vector<16x128xf32>
    %29 = arith.mulf %17, %17 : vector<16x128xf32>
    %cst_27 = arith.constant 0.0833333358 : f32
    %30 = vector.broadcast %cst_27 : f32 to vector<16x128xf32>
    %31 = arith.mulf %29, %30 : vector<16x128xf32>
    %32 = math.cos %9 : vector<16x128xf32>
    %33 = math.sin %9 : vector<16x128xf32>
    %34 = arith.mulf %32, %32 : vector<16x128xf32>
    %35 = arith.mulf %33, %33 : vector<16x128xf32>
    %36 = arith.mulf %22, %34 : vector<16x128xf32>
    %37 = arith.mulf %25, %35 : vector<16x128xf32>
    %38 = arith.addf %36, %37 : vector<16x128xf32>
    %39 = arith.mulf %22, %35 : vector<16x128xf32>
    %40 = arith.mulf %25, %34 : vector<16x128xf32>
    %41 = arith.addf %39, %40 : vector<16x128xf32>
    %42 = arith.subf %22, %25 : vector<16x128xf32>
    %43 = arith.mulf %42, %32 : vector<16x128xf32>
    %44 = arith.mulf %43, %33 : vector<16x128xf32>
    %45 = math.cos %19 : vector<16x128xf32>
    %46 = math.sin %19 : vector<16x128xf32>
    %47 = arith.mulf %45, %45 : vector<16x128xf32>
    %48 = arith.mulf %46, %46 : vector<16x128xf32>
    %49 = arith.mulf %28, %47 : vector<16x128xf32>
    %50 = arith.mulf %31, %48 : vector<16x128xf32>
    %51 = arith.addf %49, %50 : vector<16x128xf32>
    %52 = arith.mulf %28, %48 : vector<16x128xf32>
    %53 = arith.mulf %31, %47 : vector<16x128xf32>
    %54 = arith.addf %52, %53 : vector<16x128xf32>
    %55 = arith.subf %28, %31 : vector<16x128xf32>
    %56 = arith.mulf %55, %45 : vector<16x128xf32>
    %57 = arith.mulf %56, %46 : vector<16x128xf32>
    %58 = arith.addf %38, %51 : vector<16x128xf32>
    %59 = arith.addf %41, %54 : vector<16x128xf32>
    %60 = arith.addf %44, %57 : vector<16x128xf32>
    %61 = arith.subf %1, %11 : vector<16x128xf32>
    %62 = arith.subf %3, %13 : vector<16x128xf32>
    %63 = arith.mulf %62, %62 : vector<16x128xf32>
    %64 = arith.mulf %58, %63 : vector<16x128xf32>
    %65 = arith.mulf %61, %61 : vector<16x128xf32>
    %66 = arith.mulf %59, %65 : vector<16x128xf32>
    %67 = arith.addf %64, %66 : vector<16x128xf32>
    %cst_28 = arith.constant 2.500000e-01 : f32
    %68 = vector.broadcast %cst_28 : f32 to vector<16x128xf32>
    %69 = arith.mulf %68, %67 : vector<16x128xf32>
    %70 = arith.mulf %60, %61 : vector<16x128xf32>
    %71 = arith.mulf %70, %62 : vector<16x128xf32>
    %cst_29 = arith.constant 5.000000e-01 : f32
    %72 = vector.broadcast %cst_29 : f32 to vector<16x128xf32>
    %73 = arith.mulf %72, %71 : vector<16x128xf32>
    %74 = arith.subf %69, %73 : vector<16x128xf32>
    %75 = arith.mulf %58, %59 : vector<16x128xf32>
    %76 = arith.mulf %60, %60 : vector<16x128xf32>
    %77 = arith.subf %75, %76 : vector<16x128xf32>
    %78 = arith.mulf %38, %41 : vector<16x128xf32>
    %79 = arith.mulf %44, %44 : vector<16x128xf32>
    %80 = arith.subf %78, %79 : vector<16x128xf32>
    %81 = arith.mulf %51, %54 : vector<16x128xf32>
    %82 = arith.mulf %57, %57 : vector<16x128xf32>
    %83 = arith.subf %81, %82 : vector<16x128xf32>
    %84 = arith.mulf %80, %83 : vector<16x128xf32>
    %cst_30 = arith.constant 0.000000e+00 : f32
    %85 = vector.broadcast %cst_30 : f32 to vector<16x128xf32>
    %86 = arith.maximumf %84, %85 : vector<16x128xf32>
    %87 = math.sqrt %86 : vector<16x128xf32>
    %cst_31 = arith.constant 4.000000e+00 : f32
    %88 = vector.broadcast %cst_31 : f32 to vector<16x128xf32>
    %89 = arith.mulf %88, %87 : vector<16x128xf32>
    %cst_32 = arith.constant 1.000000e-03 : f32
    %90 = vector.broadcast %cst_32 : f32 to vector<16x128xf32>
    %91 = arith.addf %89, %90 : vector<16x128xf32>
    %92 = arith.divf %77, %91 : vector<16x128xf32>
    %93 = math.log %92 : vector<16x128xf32>
    %cst_33 = arith.constant 5.000000e-01 : f32
    %94 = vector.broadcast %cst_33 : f32 to vector<16x128xf32>
    %95 = arith.mulf %94, %93 : vector<16x128xf32>
    %96 = arith.divf %74, %77 : vector<16x128xf32>
    %97 = arith.addf %96, %95 : vector<16x128xf32>
    %cst_34 = arith.constant 1.000000e-03 : f32
    %cst_35 = arith.constant 1.000000e+02 : f32
    %98 = vector.broadcast %cst_34 : f32 to vector<16x128xf32>
    %99 = arith.maximumf %98, %97 : vector<16x128xf32>
    %100 = vector.broadcast %cst_35 : f32 to vector<16x128xf32>
    %101 = arith.minimumf %100, %99 : vector<16x128xf32>
    %cst_36 = arith.constant 0.000000e+00 : f32
    %102 = vector.broadcast %cst_36 : f32 to vector<16x128xf32>
    %103 = arith.subf %102, %101 : vector<16x128xf32>
    %104 = math.exp %103 : vector<16x128xf32>
    %cst_37 = arith.constant 1.000000e+00 : f32
    %105 = vector.broadcast %cst_37 : f32 to vector<16x128xf32>
    %106 = arith.subf %105, %104 : vector<16x128xf32>
    %cst_38 = arith.constant 1.000000e-03 : f32
    %107 = vector.broadcast %cst_38 : f32 to vector<16x128xf32>
    %108 = arith.addf %106, %107 : vector<16x128xf32>
    %109 = math.sqrt %108 : vector<16x128xf32>
    %c0_39 = arith.constant 0 : index
    %c0_40 = arith.constant 0 : index
    %110 = vector.load %arg3[%c0_39, %c0_40] : memref<16x128xf32, #tpu.memory_space<vmem>>, vector<16x128xf32>
    %111 = arith.mulf %109, %110 : vector<16x128xf32>
    %112 = vector.shape_cast %111 : vector<16x128xf32> to vector<2x8x128xf32>
    %cst_41 = arith.constant dense<0.000000e+00> : vector<8x128xf32>
    %113 = vector.multi_reduction <add>, %112, %cst_41 [0] : vector<2x8x128xf32> to vector<8x128xf32>
    %114 = vector.shape_cast %113 : vector<8x128xf32> to vector<1x8x128xf32>
    %c0_42 = arith.constant 0 : index
    %c0_43 = arith.constant 0 : index
    %c0_44 = arith.constant 0 : index
    %115 = vector.load %arg4[%c0_42, %c0_43, %c0_44] : memref<1x8x128xf32, #tpu.memory_space<vmem>>, vector<1x8x128xf32>
    tpu.vector_store %arg4[%c0_42, %c0_43, %c0_44], %114 {strides = array<i32>} : memref<1x8x128xf32, #tpu.memory_space<vmem>>, vector<1x8x128xf32>,
    return
  }
  func.func @transform_0(%arg0: i32) -> (i32, i32, i32) {
    %c0_i32 = arith.constant 0 : i32
    %c0_i32_0 = arith.constant 0 : i32
    %c0_i32_1 = arith.constant 0 : i32
    return %c0_i32, %arg0, %c0_i32_0 : i32, i32, i32
  }
  func.func @transform_1(%arg0: i32) -> (i32, i32, i32) {
    %c0_i32 = arith.constant 0 : i32
    %c0_i32_0 = arith.constant 0 : i32
    %c0_i32_1 = arith.constant 0 : i32
    return %c0_i32, %arg0, %c0_i32_0 : i32, i32, i32
  }
  func.func @transform_2(%arg0: i32) -> (i32, i32) {
    %c0_i32 = arith.constant 0 : i32
    %c0_i32_0 = arith.constant 0 : i32
    return %arg0, %c0_i32 : i32, i32
  }
  func.func @transform_3(%arg0: i32) -> (i32, i32, i32) {
    %c0_i32 = arith.constant 0 : i32
    %c0_i32_0 = arith.constant 0 : i32
    %c0_i32_1 = arith.constant 0 : i32
    return %arg0, %c0_i32, %c0_i32_0 : i32, i32, i32
  }
}

</mosaic_0001>

<llo_original>
// kernel: tpu_custom_call.1
$region0: #{tpu_custom_call.1}
  #allocation0 [shape = 'u32[]', space=smem, size = 0x4, offset = 0x4, fixed_abs, tag = 'smem constant byte address 0x4 - core index']
  #allocation1 [shape = 'u32[144,128]{1,0:T(1,128)}', space=vmem, size = 0x12000, scoped, tag = 'internal scratch']
  %s0 = inlined_call_operand.hbm [shape: f32[5,16,128], index: 0, kind: input, shape index: {}]
  %s1 = inlined_call_operand.hbm [shape: f32[5,16,128], index: 1, kind: input, shape index: {}]
  %s2 = inlined_call_operand.hbm [shape: f32[16,128], index: 2, kind: input, shape index: {}]
  %s3 = inlined_call_operand.hbm [shape: f32[1,8,128], index: 3, kind: output, shape index: {}]
  %s4 = sld [smem:[#allocation0]]
  $region34: #{tpu_custom_call.1} parent=0
    _
  %s6 = ssub.s32 1, %s4
  %s7 = scalar_select 0, %s6, %s4
  $region1: #{tpu_custom_call.1} parent=0
    #allocation2 [shape = 'u8[40960]{0}', space=vmem, size = 0xa000, scoped, tag = 'input window, operand 0, single buffered']
    #allocation3 [shape = 's32[1]{0}', space=sflag, size = 0x4, scoped, tag = 'scoped memory for tpu_custom_call.1']
    #allocation4 [shape = 's32[1]{0}', space=sflag, size = 0x4, scoped, tag = 'scoped memory for tpu_custom_call.1']
    #allocation5 [shape = 'u8[40960]{0}', space=vmem, size = 0xa000, scoped, tag = 'input window, operand 1, single buffered']
    #allocation6 [shape = 's32[1]{0}', space=sflag, size = 0x4, scoped, tag = 'scoped memory for tpu_custom_call.1']
    #allocation7 [shape = 'u8[8192]{0}', space=vmem, size = 0x2000, scoped, tag = 'input window, operand 2, single buffered']
    #allocation8 [shape = 'u8[4096]{0}', space=vmem, size = 0x1000, scoped, tag = 'output window, operand 0, single buffered']
    %8 = vsyncpa [#allocation3], 0
    %9 = vsyncpa [#allocation6], 0
    %10 = vsyncpa [#allocation4], 0
    // Predicated region
    $region2: #{tpu_custom_call.1} parent=1 // pred_check
      _
    $region3: #{tpu_custom_call.1} parent=1 // pred_check_branch
      %12 = sbr.rel (0) target = $region5
    $region4: #{tpu_custom_call.1} parent=1 // pred_region
      %s14 = ssub.s32 1280, 1280
      %15 = vsyncadd [#allocation3], %s14
      %s16 = sshll.u32 [#allocation2], 4
      %s17 = int_to_ptr.vmem [resolvable:$true] %s16
      %22 = dma.hbm_to_vmem [thread:$0]  %s0, 1280, %s17, [#allocation3], 128, 128, 8
    $region5: #{tpu_custom_call.1} parent=1 // pred_fallthru
      _
    // Predicated region
    $region6: #{tpu_custom_call.1} parent=1 // pred_check
      _
    $region7: #{tpu_custom_call.1} parent=1 // pred_check_branch
      %24 = sbr.rel (0) target = $region9
    $region8: #{tpu_custom_call.1} parent=1 // pred_region
      %s26 = ssub.s32 1280, 1280
      %27 = vsyncadd [#allocation6], %s26
      %s28 = sshll.u32 [#allocation5], 4
      %s29 = int_to_ptr.vmem [resolvable:$true] %s28
      %34 = dma.hbm_to_vmem [thread:$0]  %s1, 1280, %s29, [#allocation6], 128, 128, 8
    $region9: #{tpu_custom_call.1} parent=1 // pred_fallthru
      _
    // Predicated region
    $region10: #{tpu_custom_call.1} parent=1 // pred_check
      _
    $region11: #{tpu_custom_call.1} parent=1 // pred_check_branch
      %36 = sbr.rel (0) target = $region13
    $region12: #{tpu_custom_call.1} parent=1 // pred_region
      %s38 = ssub.s32 256, 256
      %39 = vsyncadd [#allocation6], %s38
      %s40 = sshll.u32 [#allocation7], 4
      %s41 = int_to_ptr.vmem [resolvable:$true] %s40
      %46 = dma.hbm_to_vmem [thread:$0]  %s2, 256, %s41, [#allocation6], 128, 128, 8
    $region13: #{tpu_custom_call.1} parent=1 // pred_fallthru
      _
    // Predicated region
    $region14: #{tpu_custom_call.1} parent=1 // pred_check
      _
    $region15: #{tpu_custom_call.1} parent=1 // pred_check_branch
      %48 = sbr.rel (0) target = $region17
    $region16: #{tpu_custom_call.1} parent=1 // pred_region
      %49 = dma.done [#allocation3], 1280
    $region17: #{tpu_custom_call.1} parent=1 // pred_fallthru
      _
    // Predicated region
    $region18: #{tpu_custom_call.1} parent=1 // pred_check
      _
    $region19: #{tpu_custom_call.1} parent=1 // pred_check_branch
      %51 = sbr.rel (0) target = $region21
    $region20: #{tpu_custom_call.1} parent=1 // pred_region
      %52 = dma.done [#allocation6], 1280
    $region21: #{tpu_custom_call.1} parent=1 // pred_fallthru
      _
    // Predicated region
    $region22: #{tpu_custom_call.1} parent=1 // pred_check
      _
    $region23: #{tpu_custom_call.1} parent=1 // pred_check_branch
      %54 = sbr.rel (0) target = $region25
    $region24: #{tpu_custom_call.1} parent=1 // pred_region
      %55 = dma.done [#allocation6], 256
    $region25: #{tpu_custom_call.1} parent=1 // pred_fallthru
      _
    %v56 = vld [vmem:[#allocation2] sm:$0xff]
    %v57 = vld [vmem:[#allocation2 + $0x8] sm:$0xff]
    %s58 = scalar_lea.vmem [#allocation2], 16
    %v59 = vld [vmem:[%s58] sm:$0xff]
    %v60 = vld [vmem:[%s58 + $0x8] sm:$0xff]
    %s61 = scalar_lea.vmem [#allocation2], 32
    %v62 = vld [vmem:[%s61] sm:$0xff]
    %v63 = vld [vmem:[%s61 + $0x8] sm:$0xff]
    %s64 = scalar_lea.vmem [#allocation2], 48
    %v65 = vld [vmem:[%s64] sm:$0xff]
    %v66 = vld [vmem:[%s64 + $0x8] sm:$0xff]
    %s67 = scalar_lea.vmem [#allocation2], 64
    %v68 = vld [vmem:[%s67] sm:$0xff]
    %v69 = vld [vmem:[%s67 + $0x8] sm:$0xff]
    %v70 = vld [vmem:[#allocation5] sm:$0xff]
    %v71 = vld [vmem:[#allocation5 + $0x8] sm:$0xff]
    %s72 = scalar_lea.vmem [#allocation5], 16
    %v73 = vld [vmem:[%s72] sm:$0xff]
    %v74 = vld [vmem:[%s72 + $0x8] sm:$0xff]
    %s75 = scalar_lea.vmem [#allocation5], 32
    %v76 = vld [vmem:[%s75] sm:$0xff]
    %v77 = vld [vmem:[%s75 + $0x8] sm:$0xff]
    %s78 = scalar_lea.vmem [#allocation5], 48
    %v79 = vld [vmem:[%s78] sm:$0xff]
    %v80 = vld [vmem:[%s78 + $0x8] sm:$0xff]
    %s81 = scalar_lea.vmem [#allocation5], 64
    %v82 = vld [vmem:[%s81] sm:$0xff]
    %v83 = vld [vmem:[%s81 + $0x8] sm:$0xff]
    %v84 = vmul.f32 %v62, %v62
    %v85 = vmul.f32 %v63, %v63
    %v86 = vmul.f32 %v84, 0.083333336
    %v87 = vmul.f32 %v85, 0.083333336
    %v88 = vmul.f32 %v65, %v65
    %v89 = vmul.f32 %v66, %v66
    %v90 = vmul.f32 %v88, 0.083333336
    %v91 = vmul.f32 %v89, 0.083333336
    %v92 = vmul.f32 %v76, %v76
    %v93 = vmul.f32 %v77, %v77
    %v94 = vmul.f32 %v92, 0.083333336
    %v95 = vmul.f32 %v93, 0.083333336
    %v96 = vmul.f32 %v79, %v79
    %v97 = vmul.f32 %v80, %v80
    %v98 = vmul.f32 %v96, 0.083333336
    %v99 = vmul.f32 %v97, 0.083333336
    %v100 = vand.u32 2147483647, %v68
    %vm101 = vcmp.le.f32.partialorder %v100, 0.7853982
    %vm102 = vcmp.lt.s32.totalorder %v68, 0
    %v103 = vand.u32 %v68, 2139095040
    %v104 = vshrl.u32 %v103, 23
    %v105 = vsub.s32 %v104, 127
    %v106 = vand.u32 2147483647, %v68
    %v107 = vand.u32 %v106, 8388607
    %v108 = vor.u32 %v107, 8388608
    %v109 = vsub.s32 0, %v108
    %v110 = vadd.s32 %v105, 1
    %vm111 = vcmp.gt.s32.totalorder %v110, 0
    %v112 = vsel %vm111, %v110, 0
    %v113 = vshrl.u32 %v112, 5
    %v114 = vand.u32 %v112, 31
    %v115 = vsub.s32 32, %v114
    %v116 = vshrl.u32 683565275, %v115
    %v117 = vshll.u32 683565275, %v114
    %v118 = vshrl.u32 2475754826, %v115
    %v119 = vor.u32 %v117, %v118
    %v120 = vshll.u32 2475754826, %v114
    %v121 = vshrl.u32 2131351028, %v115
    %v122 = vor.u32 %v120, %v121
    %v123 = vshll.u32 2131351028, %v114
    %v124 = vshrl.u32 2102212464, %v115
    %v125 = vor.u32 %v123, %v124
    %v126 = vshll.u32 2102212464, %v114
    %v127 = vshrl.u32 920167782, %v115
    %v128 = vor.u32 %v126, %v127
    %v129 = vshll.u32 920167782, %v114
    %v130 = vshrl.u32 1326507024, %v115
    %v131 = vor.u32 %v129, %v130
    %vm132 = vcmp.lt.s32.totalorder %v113, 1
    %vm133 = vcmp.lt.s32.totalorder %v113, 2
    %vm134 = vcmp.lt.s32.totalorder %v113, 3
    %vm135 = vcmp.lt.s32.totalorder %v113, 4
    %v136 = vsel %vm132, %v116, %v119
    %v137 = vsel %vm135, %v125, 2102212464
    %v138 = vsel %vm134, %v122, %v137
    %v139 = vsel %vm133, %v136, %v138
    %v140 = vsel %vm132, %v119, %v122
    %v141 = vsel %vm135, %v128, 920167782
    %v142 = vsel %vm134, %v125, %v141
    %v143 = vsel %vm133, %v140, %v142
    %v144 = vsel %vm132, %v122, %v125
    %v145 = vsel %vm135, %v131, 1326507024
    %v146 = vsel %vm134, %v128, %v145
    %v147 = vsel %vm133, %v144, %v146
    %v148 = vshll.u32 %v108, 8
    %v149 = vmul.u32.u64.compose %v148, %v147
    %v150 = vextract.low.u32 %v149
    %v151 = vextract.high.u32 %v149
    %v152 = vmul.u32.u64.compose %v148, %v143
    %v153 = vextract.low.u32 %v152
    %v154 = vextract.high.u32 %v152
    %v155 = vmul.u32 %v148, %v139
    %v156 = vadd.s32 %v151, %v153
    %vm157 = vc.u32 %v151, %v153
    %v158 = vadd.s32 %v154, 1
    %v159 = vsel %vm157, %v158, %v154
    %v160 = vadd.s32 %v155, %v159
    %v161 = vadd.s32 %v160, 536870912
    %v162 = vshrl.u32 %v161, 30
    %v163 = vshll.u32 %v162, 30
    %v164 = vsub.s32 %v160, %v163
    %vm165 = vcmp.lt.s32.totalorder %v164, 0
    %v166 = vsub.s32 0, %v164
    %v167 = vsel %vm165, %v166, %v164
    %v168 = vclz %v167
    %v169 = vsub.s32 %v168, 2
    %vm170 = vcmp.gt.s32.totalorder 0, %v169
    %v171 = vsel %vm170, 0, %v169
    %v172 = vsub.s32 32, %v171
    %v173 = vshll.u32 %v164, %v171
    %v174 = vshrl.u32 %v156, %v172
    %v175 = vor.u32 %v173, %v174
    %v176 = vsub.s32 4294967266, %v171
    %v177 = vadd.s32 %v176, 127
    %v178 = vshll.u32 %v177, 23
    %v179 = vor.u32 4788187, %v178
    %v180 = vand.u32 2147483647, %v179
    %v182 = vcvt.s32.f32 %v175
    %v183 = vmul.f32 %v182, %v180
    %v184 = vxor.u32 %v183, 2147483648
    %v185 = vsel %vm102, %v184, %v183
    %v186 = vsub.s32 4, %v162
    %v187 = vsel %vm102, %v186, %v162
    %v188 = vsel %vm101, %v68, %v185
    %v189 = vsel %vm101, 0, %v187
    %v190 = vcosq.f32.pop %v188
    %v191 = vsinq.f32.pop %v188
    %vm192 = vweird.f32 %v68
    %v193 = vand.u32 %v189, 3
    %vm194 = vcmp.lt.s32.totalorder %v193, 2
    %vm195 = vcmp.eq.s32.totalorder %v193, 0
    %v196 = vxor.u32 %v191, 2147483648
    %v197 = vsel %vm195, %v190, %v196
    %vm198 = vcmp.eq.s32.totalorder %v193, 2
    %v199 = vxor.u32 %v190, 2147483648
    %v200 = vsel %vm198, %v199, %v191
    %v201 = vsel %vm194, %v197, %v200
    %v202 = vsel %vm192, nan, %v201
    %v203 = vand.u32 2147483647, %v69
    %vm204 = vcmp.le.f32.partialorder %v203, 0.7853982
    %vm205 = vcmp.lt.s32.totalorder %v69, 0
    %v206 = vand.u32 %v69, 2139095040
    %v207 = vshrl.u32 %v206, 23
    %v208 = vsub.s32 %v207, 127
    %v209 = vand.u32 2147483647, %v69
    %v210 = vand.u32 %v209, 8388607
    %v211 = vor.u32 %v210, 8388608
    %v212 = vsub.s32 0, %v211
    %v213 = vadd.s32 %v208, 1
    %vm214 = vcmp.gt.s32.totalorder %v213, 0
    %v215 = vsel %vm214, %v213, 0
    %v216 = vshrl.u32 %v215, 5
    %v217 = vand.u32 %v215, 31
    %v218 = vsub.s32 32, %v217
    %v219 = vshrl.u32 683565275, %v218
    %v220 = vshll.u32 683565275, %v217
    %v221 = vshrl.u32 2475754826, %v218
    %v222 = vor.u32 %v220, %v221
    %v223 = vshll.u32 2475754826, %v217
    %v224 = vshrl.u32 2131351028, %v218
    %v225 = vor.u32 %v223, %v224
    %v226 = vshll.u32 2131351028, %v217
    %v227 = vshrl.u32 2102212464, %v218
    %v228 = vor.u32 %v226, %v227
    %v229 = vshll.u32 2102212464, %v217
    %v230 = vshrl.u32 920167782, %v218
    %v231 = vor.u32 %v229, %v230
    %v232 = vshll.u32 920167782, %v217
    %v233 = vshrl.u32 1326507024, %v218
    %v234 = vor.u32 %v232, %v233
    %vm235 = vcmp.lt.s32.totalorder %v216, 1
    %vm236 = vcmp.lt.s32.totalorder %v216, 2
    %vm237 = vcmp.lt.s32.totalorder %v216, 3
    %vm238 = vcmp.lt.s32.totalorder %v216, 4
    %v239 = vsel %vm235, %v219, %v222
    %v240 = vsel %vm238, %v228, 2102212464
    %v241 = vsel %vm237, %v225, %v240
    %v242 = vsel %vm236, %v239, %v241
    %v243 = vsel %vm235, %v222, %v225
    %v244 = vsel %vm238, %v231, 920167782
    %v245 = vsel %vm237, %v228, %v244
    %v246 = vsel %vm236, %v243, %v245
    %v247 = vsel %vm235, %v225, %v228
    %v248 = vsel %vm238, %v234, 1326507024
    %v249 = vsel %vm237, %v231, %v248
    %v250 = vsel %vm236, %v247, %v249
    %v251 = vshll.u32 %v211, 8
    %v252 = vmul.u32.u64.compose %v251, %v250
    %v253 = vextract.low.u32 %v252
    %v254 = vextract.high.u32 %v252
    %v255 = vmul.u32.u64.compose %v251, %v246
    %v256 = vextract.low.u32 %v255
    %v257 = vextract.high.u32 %v255
    %v258 = vmul.u32 %v251, %v242
    %v259 = vadd.s32 %v254, %v256
    %vm260 = vc.u32 %v254, %v256
    %v261 = vadd.s32 %v257, 1
    %v262 = vsel %vm260, %v261, %v257
    %v263 = vadd.s32 %v258, %v262
    %v264 = vadd.s32 %v263, 536870912
    %v265 = vshrl.u32 %v264, 30
    %v266 = vshll.u32 %v265, 30
    %v267 = vsub.s32 %v263, %v266
    %vm268 = vcmp.lt.s32.totalorder %v267, 0
    %v269 = vsub.s32 0, %v267
    %v270 = vsel %vm268, %v269, %v267
    %v271 = vclz %v270
    %v272 = vsub.s32 %v271, 2
    %vm273 = vcmp.gt.s32.totalorder 0, %v272
    %v274 = vsel %vm273, 0, %v272
    %v275 = vsub.s32 32, %v274
    %v276 = vshll.u32 %v267, %v274
    %v277 = vshrl.u32 %v259, %v275
    %v278 = vor.u32 %v276, %v277
    %v279 = vsub.s32 4294967266, %v274
    %v280 = vadd.s32 %v279, 127
    %v281 = vshll.u32 %v280, 23
    %v282 = vor.u32 4788187, %v281
    %v283 = vand.u32 2147483647, %v282
    %v285 = vcvt.s32.f32 %v278
    %v286 = vmul.f32 %v285, %v283
    %v287 = vxor.u32 %v286, 2147483648
    %v288 = vsel %vm205, %v287, %v286
    %v289 = vsub.s32 4, %v265
    %v290 = vsel %vm205, %v289, %v265
    %v291 = vsel %vm204, %v69, %v288
    %v292 = vsel %vm204, 0, %v290
    %v293 = vcosq.f32.pop %v291
    %v294 = vsinq.f32.pop %v291
    %vm295 = vweird.f32 %v69
    %v296 = vand.u32 %v292, 3
    %vm297 = vcmp.lt.s32.totalorder %v296, 2
    %vm298 = vcmp.eq.s32.totalorder %v296, 0
    %v299 = vxor.u32 %v294, 2147483648
    %v300 = vsel %vm298, %v293, %v299
    %vm301 = vcmp.eq.s32.totalorder %v296, 2
    %v302 = vxor.u32 %v293, 2147483648
    %v303 = vsel %vm301, %v302, %v294
    %v304 = vsel %vm297, %v300, %v303
    %v305 = vsel %vm295, nan, %v304
    %v306 = vand.u32 2147483647, %v68
    %vm307 = vcmp.le.f32.partialorder %v306, 0.7853982
    %vm308 = vcmp.lt.s32.totalorder %v68, 0
    %v309 = vand.u32 %v68, 2139095040
    %v310 = vshrl.u32 %v309, 23
    %v311 = vsub.s32 %v310, 127
    %v312 = vand.u32 2147483647, %v68
    %v313 = vand.u32 %v312, 8388607
    %v314 = vor.u32 %v313, 8388608
    %v315 = vsub.s32 0, %v314
    %v316 = vadd.s32 %v311, 1
    %vm317 = vcmp.gt.s32.totalorder %v316, 0
    %v318 = vsel %vm317, %v316, 0
    %v319 = vshrl.u32 %v318, 5
    %v320 = vand.u32 %v318, 31
    %v321 = vsub.s32 32, %v320
    %v322 = vshrl.u32 683565275, %v321
    %v323 = vshll.u32 683565275, %v320
    %v324 = vshrl.u32 2475754826, %v321
    %v325 = vor.u32 %v323, %v324
    %v326 = vshll.u32 2475754826, %v320
    %v327 = vshrl.u32 2131351028, %v321
    %v328 = vor.u32 %v326, %v327
    %v329 = vshll.u32 2131351028, %v320
    %v330 = vshrl.u32 2102212464, %v321
    %v331 = vor.u32 %v329, %v330
    %v332 = vshll.u32 2102212464, %v320
    %v333 = vshrl.u32 920167782, %v321
    %v334 = vor.u32 %v332, %v333
    %v335 = vshll.u32 920167782, %v320
    %v336 = vshrl.u32 1326507024, %v321
    %v337 = vor.u32 %v335, %v336
    %vm338 = vcmp.lt.s32.totalorder %v319, 1
    %vm339 = vcmp.lt.s32.totalorder %v319, 2
    %vm340 = vcmp.lt.s32.totalorder %v319, 3
    %vm341 = vcmp.lt.s32.totalorder %v319, 4
    %v342 = vsel %vm338, %v322, %v325
    %v343 = vsel %vm341, %v331, 2102212464
    %v344 = vsel %vm340, %v328, %v343
    %v345 = vsel %vm339, %v342, %v344
    %v346 = vsel %vm338, %v325, %v328
    %v347 = vsel %vm341, %v334, 920167782
    %v348 = vsel %vm340, %v331, %v347
    %v349 = vsel %vm339, %v346, %v348
    %v350 = vsel %vm338, %v328, %v331
    %v351 = vsel %vm341, %v337, 1326507024
    %v352 = vsel %vm340, %v334, %v351
    %v353 = vsel %vm339, %v350, %v352
    %v354 = vshll.u32 %v314, 8
    %v355 = vmul.u32.u64.compose %v354, %v353
    %v356 = vextract.low.u32 %v355
    %v357 = vextract.high.u32 %v355
    %v358 = vmul.u32.u64.compose %v354, %v349
    %v359 = vextract.low.u32 %v358
    %v360 = vextract.high.u32 %v358
    %v361 = vmul.u32 %v354, %v345
    %v362 = vadd.s32 %v357, %v359
    %vm363 = vc.u32 %v357, %v359
    %v364 = vadd.s32 %v360, 1
    %v365 = vsel %vm363, %v364, %v360
    %v366 = vadd.s32 %v361, %v365
    %v367 = vadd.s32 %v366, 536870912
    %v368 = vshrl.u32 %v367, 30
    %v369 = vshll.u32 %v368, 30
    %v370 = vsub.s32 %v366, %v369
    %vm371 = vcmp.lt.s32.totalorder %v370, 0
    %v372 = vsub.s32 0, %v370
    %v373 = vsel %vm371, %v372, %v370
    %v374 = vclz %v373
    %v375 = vsub.s32 %v374, 2
    %vm376 = vcmp.gt.s32.totalorder 0, %v375
    %v377 = vsel %vm376, 0, %v375
    %v378 = vsub.s32 32, %v377
    %v379 = vshll.u32 %v370, %v377
    %v380 = vshrl.u32 %v362, %v378
    %v381 = vor.u32 %v379, %v380
    %v382 = vsub.s32 4294967266, %v377
    %v383 = vadd.s32 %v382, 127
    %v384 = vshll.u32 %v383, 23
    %v385 = vor.u32 4788187, %v384
    %v386 = vand.u32 2147483647, %v385
    %v388 = vcvt.s32.f32 %v381
    %v389 = vmul.f32 %v388, %v386
    %v390 = vxor.u32 %v389, 2147483648
    %v391 = vsel %vm308, %v390, %v389
    %v392 = vsub.s32 4, %v368
    %v393 = vsel %vm308, %v392, %v368
    %v394 = vsel %vm307, %v68, %v391
    %v395 = vsel %vm307, 0, %v393
    %v396 = vcosq.f32.pop %v394
    %v397 = vsinq.f32.pop %v394
    %vm398 = vweird.f32 %v68
    %v399 = vadd.s32 %v395, 3
    %v400 = vand.u32 %v399, 3
    %vm401 = vcmp.lt.s32.totalorder %v400, 2
    %vm402 = vcmp.eq.s32.totalorder %v400, 0
    %v403 = vxor.u32 %v397, 2147483648
    %v404 = vsel %vm402, %v396, %v403
    %vm405 = vcmp.eq.s32.totalorder %v400, 2
    %v406 = vxor.u32 %v396, 2147483648
    %v407 = vsel %vm405, %v406, %v397
    %v408 = vsel %vm401, %v404, %v407
    %v409 = vsel %vm398, nan, %v408
    %v410 = vand.u32 2147483647, %v69
    %vm411 = vcmp.le.f32.partialorder %v410, 0.7853982
    %vm412 = vcmp.lt.s32.totalorder %v69, 0
    %v413 = vand.u32 %v69, 2139095040
    %v414 = vshrl.u32 %v413, 23
    %v415 = vsub.s32 %v414, 127
    %v416 = vand.u32 2147483647, %v69
    %v417 = vand.u32 %v416, 8388607
    %v418 = vor.u32 %v417, 8388608
    %v419 = vsub.s32 0, %v418
    %v420 = vadd.s32 %v415, 1
    %vm421 = vcmp.gt.s32.totalorder %v420, 0
    %v422 = vsel %vm421, %v420, 0
    %v423 = vshrl.u32 %v422, 5
    %v424 = vand.u32 %v422, 31
    %v425 = vsub.s32 32, %v424
    %v426 = vshrl.u32 683565275, %v425
    %v427 = vshll.u32 683565275, %v424
    %v428 = vshrl.u32 2475754826, %v425
    %v429 = vor.u32 %v427, %v428
    %v430 = vshll.u32 2475754826, %v424
    %v431 = vshrl.u32 2131351028, %v425
    %v432 = vor.u32 %v430, %v431
    %v433 = vshll.u32 2131351028, %v424
    %v434 = vshrl.u32 2102212464, %v425
    %v435 = vor.u32 %v433, %v434
    %v436 = vshll.u32 2102212464, %v424
    %v437 = vshrl.u32 920167782, %v425
    %v438 = vor.u32 %v436, %v437
    %v439 = vshll.u32 920167782, %v424
    %v440 = vshrl.u32 1326507024, %v425
    %v441 = vor.u32 %v439, %v440
    %vm442 = vcmp.lt.s32.totalorder %v423, 1
    %vm443 = vcmp.lt.s32.totalorder %v423, 2
    %vm444 = vcmp.lt.s32.totalorder %v423, 3
    %vm445 = vcmp.lt.s32.totalorder %v423, 4
    %v446 = vsel %vm442, %v426, %v429
    %v447 = vsel %vm445, %v435, 2102212464
    %v448 = vsel %vm444, %v432, %v447
    %v449 = vsel %vm443, %v446, %v448
    %v450 = vsel %vm442, %v429, %v432
    %v451 = vsel %vm445, %v438, 920167782
    %v452 = vsel %vm444, %v435, %v451
    %v453 = vsel %vm443, %v450, %v452
    %v454 = vsel %vm442, %v432, %v435
    %v455 = vsel %vm445, %v441, 1326507024
    %v456 = vsel %vm444, %v438, %v455
    %v457 = vsel %vm443, %v454, %v456
    %v458 = vshll.u32 %v418, 8
    %v459 = vmul.u32.u64.compose %v458, %v457
    %v460 = vextract.low.u32 %v459
    %v461 = vextract.high.u32 %v459
    %v462 = vmul.u32.u64.compose %v458, %v453
    %v463 = vextract.low.u32 %v462
    %v464 = vextract.high.u32 %v462
    %v465 = vmul.u32 %v458, %v449
    %v466 = vadd.s32 %v461, %v463
    %vm467 = vc.u32 %v461, %v463
    %v468 = vadd.s32 %v464, 1
    %v469 = vsel %vm467, %v468, %v464
    %v470 = vadd.s32 %v465, %v469
    %v471 = vadd.s32 %v470, 536870912
    %v472 = vshrl.u32 %v471, 30
    %v473 = vshll.u32 %v472, 30
    %v474 = vsub.s32 %v470, %v473
    %vm475 = vcmp.lt.s32.totalorder %v474, 0
    %v476 = vsub.s32 0, %v474
    %v477 = vsel %vm475, %v476, %v474
    %v478 = vclz %v477
    %v479 = vsub.s32 %v478, 2
    %vm480 = vcmp.gt.s32.totalorder 0, %v479
    %v481 = vsel %vm480, 0, %v479
    %v482 = vsub.s32 32, %v481
    %v483 = vshll.u32 %v474, %v481
    %v484 = vshrl.u32 %v466, %v482
    %v485 = vor.u32 %v483, %v484
    %v486 = vsub.s32 4294967266, %v481
    %v487 = vadd.s32 %v486, 127
    %v488 = vshll.u32 %v487, 23
    %v489 = vor.u32 4788187, %v488
    %v490 = vand.u32 2147483647, %v489
    %v492 = vcvt.s32.f32 %v485
    %v493 = vmul.f32 %v492, %v490
    %v494 = vxor.u32 %v493, 2147483648
    %v495 = vsel %vm412, %v494, %v493
    %v496 = vsub.s32 4, %v472
    %v497 = vsel %vm412, %v496, %v472
    %v498 = vsel %vm411, %v69, %v495
    %v499 = vsel %vm411, 0, %v497
    %v500 = vcosq.f32.pop %v498
    %v501 = vsinq.f32.pop %v498
    %vm502 = vweird.f32 %v69
    %v503 = vadd.s32 %v499, 3
    %v504 = vand.u32 %v503, 3
    %vm505 = vcmp.lt.s32.totalorder %v504, 2
    %vm506 = vcmp.eq.s32.totalorder %v504, 0
    %v507 = vxor.u32 %v501, 2147483648
    %v508 = vsel %vm506, %v500, %v507
    %vm509 = vcmp.eq.s32.totalorder %v504, 2
    %v510 = vxor.u32 %v500, 2147483648
    %v511 = vsel %vm509, %v510, %v501
    %v512 = vsel %vm505, %v508, %v511
    %v513 = vsel %vm502, nan, %v512
    %v514 = vmul.f32 %v202, %v202
    %v515 = vmul.f32 %v305, %v305
    %v516 = vmul.f32 %v409, %v409
    %v517 = vmul.f32 %v513, %v513
    %v518 = vmul.f32 %v86, %v514
    %v519 = vmul.f32 %v87, %v515
    %v520 = vmul.f32 %v90, %v516
    %v521 = vmul.f32 %v91, %v517
    %v522 = vadd.f32 %v518, %v520
    %v523 = vadd.f32 %v519, %v521
    %v524 = vmul.f32 %v86, %v516
    %v525 = vmul.f32 %v87, %v517
    %v526 = vmul.f32 %v90, %v514
    %v527 = vmul.f32 %v91, %v515
    %v528 = vadd.f32 %v524, %v526
    %v529 = vadd.f32 %v525, %v527
    %v530 = vsub.f32 %v86, %v90
    %v531 = vsub.f32 %v87, %v91
    %v532 = vmul.f32 %v530, %v202
    %v533 = vmul.f32 %v531, %v305
    %v534 = vmul.f32 %v532, %v409
    %v535 = vmul.f32 %v533, %v513
    %v536 = vand.u32 2147483647, %v82
    %vm537 = vcmp.le.f32.partialorder %v536, 0.7853982
    %vm538 = vcmp.lt.s32.totalorder %v82, 0
    %v539 = vand.u32 %v82, 2139095040
    %v540 = vshrl.u32 %v539, 23
    %v541 = vsub.s32 %v540, 127
    %v542 = vand.u32 2147483647, %v82
    %v543 = vand.u32 %v542, 8388607
    %v544 = vor.u32 %v543, 8388608
    %v545 = vsub.s32 0, %v544
    %v546 = vadd.s32 %v541, 1
    %vm547 = vcmp.gt.s32.totalorder %v546, 0
    %v548 = vsel %vm547, %v546, 0
    %v549 = vshrl.u32 %v548, 5
    %v550 = vand.u32 %v548, 31
    %v551 = vsub.s32 32, %v550
    %v552 = vshrl.u32 683565275, %v551
    %v553 = vshll.u32 683565275, %v550
    %v554 = vshrl.u32 2475754826, %v551
    %v555 = vor.u32 %v553, %v554
    %v556 = vshll.u32 2475754826, %v550
    %v557 = vshrl.u32 2131351028, %v551
    %v558 = vor.u32 %v556, %v557
    %v559 = vshll.u32 2131351028, %v550
    %v560 = vshrl.u32 2102212464, %v551
    %v561 = vor.u32 %v559, %v560
    %v562 = vshll.u32 2102212464, %v550
    %v563 = vshrl.u32 920167782, %v551
    %v564 = vor.u32 %v562, %v563
    %v565 = vshll.u32 920167782, %v550
    %v566 = vshrl.u32 1326507024, %v551
    %v567 = vor.u32 %v565, %v566
    %vm568 = vcmp.lt.s32.totalorder %v549, 1
    %vm569 = vcmp.lt.s32.totalorder %v549, 2
    %vm570 = vcmp.lt.s32.totalorder %v549, 3
    %vm571 = vcmp.lt.s32.totalorder %v549, 4
    %v572 = vsel %vm568, %v552, %v555
    %v573 = vsel %vm571, %v561, 2102212464
    %v574 = vsel %vm570, %v558, %v573
    %v575 = vsel %vm569, %v572, %v574
    %v576 = vsel %vm568, %v555, %v558
    %v577 = vsel %vm571, %v564, 920167782
    %v578 = vsel %vm570, %v561, %v577
    %v579 = vsel %vm569, %v576, %v578
    %v580 = vsel %vm568, %v558, %v561
    %v581 = vsel %vm571, %v567, 1326507024
    %v582 = vsel %vm570, %v564, %v581
    %v583 = vsel %vm569, %v580, %v582
    %v584 = vshll.u32 %v544, 8
    %v585 = vmul.u32.u64.compose %v584, %v583
    %v586 = vextract.low.u32 %v585
    %v587 = vextract.high.u32 %v585
    %v588 = vmul.u32.u64.compose %v584, %v579
    %v589 = vextract.low.u32 %v588
    %v590 = vextract.high.u32 %v588
    %v591 = vmul.u32 %v584, %v575
    %v592 = vadd.s32 %v587, %v589
    %vm593 = vc.u32 %v587, %v589
    %v594 = vadd.s32 %v590, 1
    %v595 = vsel %vm593, %v594, %v590
    %v596 = vadd.s32 %v591, %v595
    %v597 = vadd.s32 %v596, 536870912
    %v598 = vshrl.u32 %v597, 30
    %v599 = vshll.u32 %v598, 30
    %v600 = vsub.s32 %v596, %v599
    %vm601 = vcmp.lt.s32.totalorder %v600, 0
    %v602 = vsub.s32 0, %v600
    %v603 = vsel %vm601, %v602, %v600
    %v604 = vclz %v603
    %v605 = vsub.s32 %v604, 2
    %vm606 = vcmp.gt.s32.totalorder 0, %v605
    %v607 = vsel %vm606, 0, %v605
    %v608 = vsub.s32 32, %v607
    %v609 = vshll.u32 %v600, %v607
    %v610 = vshrl.u32 %v592, %v608
    %v611 = vor.u32 %v609, %v610
    %v612 = vsub.s32 4294967266, %v607
    %v613 = vadd.s32 %v612, 127
    %v614 = vshll.u32 %v613, 23
    %v615 = vor.u32 4788187, %v614
    %v616 = vand.u32 2147483647, %v615
    %v618 = vcvt.s32.f32 %v611
    %v619 = vmul.f32 %v618, %v616
    %v620 = vxor.u32 %v619, 2147483648
    %v621 = vsel %vm538, %v620, %v619
    %v622 = vsub.s32 4, %v598
    %v623 = vsel %vm538, %v622, %v598
    %v624 = vsel %vm537, %v82, %v621
    %v625 = vsel %vm537, 0, %v623
    %v626 = vcosq.f32.pop %v624
    %v627 = vsinq.f32.pop %v624
    %vm628 = vweird.f32 %v82
    %v629 = vand.u32 %v625, 3
    %vm630 = vcmp.lt.s32.totalorder %v629, 2
    %vm631 = vcmp.eq.s32.totalorder %v629, 0
    %v632 = vxor.u32 %v627, 2147483648
    %v633 = vsel %vm631, %v626, %v632
    %vm634 = vcmp.eq.s32.totalorder %v629, 2
    %v635 = vxor.u32 %v626, 2147483648
    %v636 = vsel %vm634, %v635, %v627
    %v637 = vsel %vm630, %v633, %v636
    %v638 = vsel %vm628, nan, %v637
    %v639 = vand.u32 2147483647, %v83
    %vm640 = vcmp.le.f32.partialorder %v639, 0.7853982
    %vm641 = vcmp.lt.s32.totalorder %v83, 0
    %v642 = vand.u32 %v83, 2139095040
    %v643 = vshrl.u32 %v642, 23
    %v644 = vsub.s32 %v643, 127
    %v645 = vand.u32 2147483647, %v83
    %v646 = vand.u32 %v645, 8388607
    %v647 = vor.u32 %v646, 8388608
    %v648 = vsub.s32 0, %v647
    %v649 = vadd.s32 %v644, 1
    %vm650 = vcmp.gt.s32.totalorder %v649, 0
    %v651 = vsel %vm650, %v649, 0
    %v652 = vshrl.u32 %v651, 5
    %v653 = vand.u32 %v651, 31
    %v654 = vsub.s32 32, %v653
    %v655 = vshrl.u32 683565275, %v654
    %v656 = vshll.u32 683565275, %v653
    %v657 = vshrl.u32 2475754826, %v654
    %v658 = vor.u32 %v656, %v657
    %v659 = vshll.u32 2475754826, %v653
    %v660 = vshrl.u32 2131351028, %v654
    %v661 = vor.u32 %v659, %v660
    %v662 = vshll.u32 2131351028, %v653
    %v663 = vshrl.u32 2102212464, %v654
    %v664 = vor.u32 %v662, %v663
    %v665 = vshll.u32 2102212464, %v653
    %v666 = vshrl.u32 920167782, %v654
    %v667 = vor.u32 %v665, %v666
    %v668 = vshll.u32 920167782, %v653
    %v669 = vshrl.u32 1326507024, %v654
    %v670 = vor.u32 %v668, %v669
    %vm671 = vcmp.lt.s32.totalorder %v652, 1
    %vm672 = vcmp.lt.s32.totalorder %v652, 2
    %vm673 = vcmp.lt.s32.totalorder %v652, 3
    %vm674 = vcmp.lt.s32.totalorder %v652, 4
    %v675 = vsel %vm671, %v655, %v658
    %v676 = vsel %vm674, %v664, 2102212464
    %v677 = vsel %vm673, %v661, %v676
    %v678 = vsel %vm672, %v675, %v677
    %v679 = vsel %vm671, %v658, %v661
    %v680 = vsel %vm674, %v667, 920167782
    %v681 = vsel %vm673, %v664, %v680
    %v682 = vsel %vm672, %v679, %v681
    %v683 = vsel %vm671, %v661, %v664
    %v684 = vsel %vm674, %v670, 1326507024
    %v685 = vsel %vm673, %v667, %v684
    %v686 = vsel %vm672, %v683, %v685
    %v687 = vshll.u32 %v647, 8
    %v688 = vmul.u32.u64.compose %v687, %v686
    %v689 = vextract.low.u32 %v688
    %v690 = vextract.high.u32 %v688
    %v691 = vmul.u32.u64.compose %v687, %v682
    %v692 = vextract.low.u32 %v691
    %v693 = vextract.high.u32 %v691
    %v694 = vmul.u32 %v687, %v678
    %v695 = vadd.s32 %v690, %v692
    %vm696 = vc.u32 %v690, %v692
    %v697 = vadd.s32 %v693, 1
    %v698 = vsel %vm696, %v697, %v693
    %v699 = vadd.s32 %v694, %v698
    %v700 = vadd.s32 %v699, 536870912
    %v701 = vshrl.u32 %v700, 30
    %v702 = vshll.u32 %v701, 30
    %v703 = vsub.s32 %v699, %v702
    %vm704 = vcmp.lt.s32.totalorder %v703, 0
    %v705 = vsub.s32 0, %v703
    %v706 = vsel %vm704, %v705, %v703
    %v707 = vclz %v706
    %v708 = vsub.s32 %v707, 2
    %vm709 = vcmp.gt.s32.totalorder 0, %v708
    %v710 = vsel %vm709, 0, %v708
    %v711 = vsub.s32 32, %v710
    %v712 = vshll.u32 %v703, %v710
    %v713 = vshrl.u32 %v695, %v711
    %v714 = vor.u32 %v712, %v713
    %v715 = vsub.s32 4294967266, %v710
    %v716 = vadd.s32 %v715, 127
    %v717 = vshll.u32 %v716, 23
    %v718 = vor.u32 4788187, %v717
    %v719 = vand.u32 2147483647, %v718
    %v721 = vcvt.s32.f32 %v714
    %v722 = vmul.f32 %v721, %v719
    %v723 = vxor.u32 %v722, 2147483648
    %v724 = vsel %vm641, %v723, %v722
    %v725 = vsub.s32 4, %v701
    %v726 = vsel %vm641, %v725, %v701
    %v727 = vsel %vm640, %v83, %v724
    %v728 = vsel %vm640, 0, %v726
    %v729 = vcosq.f32.pop %v727
    %v730 = vsinq.f32.pop %v727
    %vm731 = vweird.f32 %v83
    %v732 = vand.u32 %v728, 3
    %vm733 = vcmp.lt.s32.totalorder %v732, 2
    %vm734 = vcmp.eq.s32.totalorder %v732, 0
    %v735 = vxor.u32 %v730, 2147483648
    %v736 = vsel %vm734, %v729, %v735
    %vm737 = vcmp.eq.s32.totalorder %v732, 2
    %v738 = vxor.u32 %v729, 2147483648
    %v739 = vsel %vm737, %v738, %v730
    %v740 = vsel %vm733, %v736, %v739
    %v741 = vsel %vm731, nan, %v740
    %v742 = vand.u32 2147483647, %v82
    %vm743 = vcmp.le.f32.partialorder %v742, 0.7853982
    %vm744 = vcmp.lt.s32.totalorder %v82, 0
    %v745 = vand.u32 %v82, 2139095040
    %v746 = vshrl.u32 %v745, 23
    %v747 = vsub.s32 %v746, 127
    %v748 = vand.u32 2147483647, %v82
    %v749 = vand.u32 %v748, 8388607
    %v750 = vor.u32 %v749, 8388608
    %v751 = vsub.s32 0, %v750
    %v752 = vadd.s32 %v747, 1
    %vm753 = vcmp.gt.s32.totalorder %v752, 0
    %v754 = vsel %vm753, %v752, 0
    %v755 = vshrl.u32 %v754, 5
    %v756 = vand.u32 %v754, 31
    %v757 = vsub.s32 32, %v756
    %v758 = vshrl.u32 683565275, %v757
    %v759 = vshll.u32 683565275, %v756
    %v760 = vshrl.u32 2475754826, %v757
    %v761 = vor.u32 %v759, %v760
    %v762 = vshll.u32 2475754826, %v756
    %v763 = vshrl.u32 2131351028, %v757
    %v764 = vor.u32 %v762, %v763
    %v765 = vshll.u32 2131351028, %v756
    %v766 = vshrl.u32 2102212464, %v757
    %v767 = vor.u32 %v765, %v766
    %v768 = vshll.u32 2102212464, %v756
    %v769 = vshrl.u32 920167782, %v757
    %v770 = vor.u32 %v768, %v769
    %v771 = vshll.u32 920167782, %v756
    %v772 = vshrl.u32 1326507024, %v757
    %v773 = vor.u32 %v771, %v772
    %vm774 = vcmp.lt.s32.totalorder %v755, 1
    %vm775 = vcmp.lt.s32.totalorder %v755, 2
    %vm776 = vcmp.lt.s32.totalorder %v755, 3
    %vm777 = vcmp.lt.s32.totalorder %v755, 4
    %v778 = vsel %vm774, %v758, %v761
    %v779 = vsel %vm777, %v767, 2102212464
    %v780 = vsel %vm776, %v764, %v779
    %v781 = vsel %vm775, %v778, %v780
    %v782 = vsel %vm774, %v761, %v764
    %v783 = vsel %vm777, %v770, 920167782
    %v784 = vsel %vm776, %v767, %v783
    %v785 = vsel %vm775, %v782, %v784
    %v786 = vsel %vm774, %v764, %v767
    %v787 = vsel %vm777, %v773, 1326507024
    %v788 = vsel %vm776, %v770, %v787
    %v789 = vsel %vm775, %v786, %v788
    %v790 = vshll.u32 %v750, 8
    %v791 = vmul.u32.u64.compose %v790, %v789
    %v792 = vextract.low.u32 %v791
    %v793 = vextract.high.u32 %v791
    %v794 = vmul.u32.u64.compose %v790, %v785
    %v795 = vextract.low.u32 %v794
    %v796 = vextract.high.u32 %v794
    %v797 = vmul.u32 %v790, %v781
    %v798 = vadd.s32 %v793, %v795
    %vm799 = vc.u32 %v793, %v795
    %v800 = vadd.s32 %v796, 1
    %v801 = vsel %vm799, %v800, %v796
    %v802 = vadd.s32 %v797, %v801
    %v803 = vadd.s32 %v802, 536870912
    %v804 = vshrl.u32 %v803, 30
    %v805 = vshll.u32 %v804, 30
    %v806 = vsub.s32 %v802, %v805
    %vm807 = vcmp.lt.s32.totalorder %v806, 0
    %v808 = vsub.s32 0, %v806
    %v809 = vsel %vm807, %v808, %v806
    %v810 = vclz %v809
    %v811 = vsub.s32 %v810, 2
    %vm812 = vcmp.gt.s32.totalorder 0, %v811
    %v813 = vsel %vm812, 0, %v811
    %v814 = vsub.s32 32, %v813
    %v815 = vshll.u32 %v806, %v813
    %v816 = vshrl.u32 %v798, %v814
    %v817 = vor.u32 %v815, %v816
    %v818 = vsub.s32 4294967266, %v813
    %v819 = vadd.s32 %v818, 127
    %v820 = vshll.u32 %v819, 23
    %v821 = vor.u32 4788187, %v820
    %v822 = vand.u32 2147483647, %v821
    %v824 = vcvt.s32.f32 %v817
    %v825 = vmul.f32 %v824, %v822
    %v826 = vxor.u32 %v825, 2147483648
    %v827 = vsel %vm744, %v826, %v825
    %v828 = vsub.s32 4, %v804
    %v829 = vsel %vm744, %v828, %v804
    %v830 = vsel %vm743, %v82, %v827
    %v831 = vsel %vm743, 0, %v829
    %v832 = vcosq.f32.pop %v830
    %v833 = vsinq.f32.pop %v830
    %vm834 = vweird.f32 %v82
    %v835 = vadd.s32 %v831, 3
    %v836 = vand.u32 %v835, 3
    %vm837 = vcmp.lt.s32.totalorder %v836, 2
    %vm838 = vcmp.eq.s32.totalorder %v836, 0
    %v839 = vxor.u32 %v833, 2147483648
    %v840 = vsel %vm838, %v832, %v839
    %vm841 = vcmp.eq.s32.totalorder %v836, 2
    %v842 = vxor.u32 %v832, 2147483648
    %v843 = vsel %vm841, %v842, %v833
    %v844 = vsel %vm837, %v840, %v843
    %v845 = vsel %vm834, nan, %v844
    %v846 = vand.u32 2147483647, %v83
    %vm847 = vcmp.le.f32.partialorder %v846, 0.7853982
    %vm848 = vcmp.lt.s32.totalorder %v83, 0
    %v849 = vand.u32 %v83, 2139095040
    %v850 = vshrl.u32 %v849, 23
    %v851 = vsub.s32 %v850, 127
    %v852 = vand.u32 2147483647, %v83
    %v853 = vand.u32 %v852, 8388607
    %v854 = vor.u32 %v853, 8388608
    %v855 = vsub.s32 0, %v854
    %v856 = vadd.s32 %v851, 1
    %vm857 = vcmp.gt.s32.totalorder %v856, 0
    %v858 = vsel %vm857, %v856, 0
    %v859 = vshrl.u32 %v858, 5
    %v860 = vand.u32 %v858, 31
    %v861 = vsub.s32 32, %v860
    %v862 = vshrl.u32 683565275, %v861
    %v863 = vshll.u32 683565275, %v860
    %v864 = vshrl.u32 2475754826, %v861
    %v865 = vor.u32 %v863, %v864
    %v866 = vshll.u32 2475754826, %v860
    %v867 = vshrl.u32 2131351028, %v861
    %v868 = vor.u32 %v866, %v867
    %v869 = vshll.u32 2131351028, %v860
    %v870 = vshrl.u32 2102212464, %v861
    %v871 = vor.u32 %v869, %v870
    %v872 = vshll.u32 2102212464, %v860
    %v873 = vshrl.u32 920167782, %v861
    %v874 = vor.u32 %v872, %v873
    %v875 = vshll.u32 920167782, %v860
    %v876 = vshrl.u32 1326507024, %v861
    %v877 = vor.u32 %v875, %v876
    %vm878 = vcmp.lt.s32.totalorder %v859, 1
    %vm879 = vcmp.lt.s32.totalorder %v859, 2
    %vm880 = vcmp.lt.s32.totalorder %v859, 3
    %vm881 = vcmp.lt.s32.totalorder %v859, 4
    %v882 = vsel %vm878, %v862, %v865
    %v883 = vsel %vm881, %v871, 2102212464
    %v884 = vsel %vm880, %v868, %v883
    %v885 = vsel %vm879, %v882, %v884
    %v886 = vsel %vm878, %v865, %v868
    %v887 = vsel %vm881, %v874, 920167782
    %v888 = vsel %vm880, %v871, %v887
    %v889 = vsel %vm879, %v886, %v888
    %v890 = vsel %vm878, %v868, %v871
    %v891 = vsel %vm881, %v877, 1326507024
    %v892 = vsel %vm880, %v874, %v891
    %v893 = vsel %vm879, %v890, %v892
    %v894 = vshll.u32 %v854, 8
    %v895 = vmul.u32.u64.compose %v894, %v893
    %v896 = vextract.low.u32 %v895
    %v897 = vextract.high.u32 %v895
    %v898 = vmul.u32.u64.compose %v894, %v889
    %v899 = vextract.low.u32 %v898
    %v900 = vextract.high.u32 %v898
    %v901 = vmul.u32 %v894, %v885
    %v902 = vadd.s32 %v897, %v899
    %vm903 = vc.u32 %v897, %v899
    %v904 = vadd.s32 %v900, 1
    %v905 = vsel %vm903, %v904, %v900
    %v906 = vadd.s32 %v901, %v905
    %v907 = vadd.s32 %v906, 536870912
    %v908 = vshrl.u32 %v907, 30
    %v909 = vshll.u32 %v908, 30
    %v910 = vsub.s32 %v906, %v909
    %vm911 = vcmp.lt.s32.totalorder %v910, 0
    %v912 = vsub.s32 0, %v910
    %v913 = vsel %vm911, %v912, %v910
    %v914 = vclz %v913
    %v915 = vsub.s32 %v914, 2
    %vm916 = vcmp.gt.s32.totalorder 0, %v915
    %v917 = vsel %vm916, 0, %v915
    %v918 = vsub.s32 32, %v917
    %v919 = vshll.u32 %v910, %v917
    %v920 = vshrl.u32 %v902, %v918
    %v921 = vor.u32 %v919, %v920
    %v922 = vsub.s32 4294967266, %v917
    %v923 = vadd.s32 %v922, 127
    %v924 = vshll.u32 %v923, 23
    %v925 = vor.u32 4788187, %v924
    %v926 = vand.u32 2147483647, %v925
    %v928 = vcvt.s32.f32 %v921
    %v929 = vmul.f32 %v928, %v926
    %v930 = vxor.u32 %v929, 2147483648
    %v931 = vsel %vm848, %v930, %v929
    %v932 = vsub.s32 4, %v908
    %v933 = vsel %vm848, %v932, %v908
    %v934 = vsel %vm847, %v83, %v931
    %v935 = vsel %vm847, 0, %v933
    %v936 = vcosq.f32.pop %v934
    %v937 = vsinq.f32.pop %v934
    %vm938 = vweird.f32 %v83
    %v939 = vadd.s32 %v935, 3
    %v940 = vand.u32 %v939, 3
    %vm941 = vcmp.lt.s32.totalorder %v940, 2
    %vm942 = vcmp.eq.s32.totalorder %v940, 0
    %v943 = vxor.u32 %v937, 2147483648
    %v944 = vsel %vm942, %v936, %v943
    %vm945 = vcmp.eq.s32.totalorder %v940, 2
    %v946 = vxor.u32 %v936, 2147483648
    %v947 = vsel %vm945, %v946, %v937
    %v948 = vsel %vm941, %v944, %v947
    %v949 = vsel %vm938, nan, %v948
    %v950 = vmul.f32 %v638, %v638
    %v951 = vmul.f32 %v741, %v741
    %v952 = vmul.f32 %v845, %v845
    %v953 = vmul.f32 %v949, %v949
    %v954 = vmul.f32 %v94, %v950
    %v955 = vmul.f32 %v95, %v951
    %v956 = vmul.f32 %v98, %v952
    %v957 = vmul.f32 %v99, %v953
    %v958 = vadd.f32 %v954, %v956
    %v959 = vadd.f32 %v955, %v957
    %v960 = vmul.f32 %v94, %v952
    %v961 = vmul.f32 %v95, %v953
    %v962 = vmul.f32 %v98, %v950
    %v963 = vmul.f32 %v99, %v951
    %v964 = vadd.f32 %v960, %v962
    %v965 = vadd.f32 %v961, %v963
    %v966 = vsub.f32 %v94, %v98
    %v967 = vsub.f32 %v95, %v99
    %v968 = vmul.f32 %v966, %v638
    %v969 = vmul.f32 %v967, %v741
    %v970 = vmul.f32 %v968, %v845
    %v971 = vmul.f32 %v969, %v949
    %v972 = vadd.f32 %v522, %v958
    %v973 = vadd.f32 %v523, %v959
    %v974 = vadd.f32 %v528, %v964
    %v975 = vadd.f32 %v529, %v965
    %v976 = vadd.f32 %v534, %v970
    %v977 = vadd.f32 %v535, %v971
    %v978 = vsub.f32 %v56, %v70
    %v979 = vsub.f32 %v57, %v71
    %v980 = vsub.f32 %v59, %v73
    %v981 = vsub.f32 %v60, %v74
    %v982 = vmul.f32 %v980, %v980
    %v983 = vmul.f32 %v981, %v981
    %v984 = vmul.f32 %v972, %v982
    %v985 = vmul.f32 %v973, %v983
    %v986 = vmul.f32 %v978, %v978
    %v987 = vmul.f32 %v979, %v979
    %v988 = vmul.f32 %v974, %v986
    %v989 = vmul.f32 %v975, %v987
    %v990 = vadd.f32 %v984, %v988
    %v991 = vadd.f32 %v985, %v989
    %v992 = vmul.f32 %v990, 0.25
    %v993 = vmul.f32 %v991, 0.25
    %v994 = vmul.f32 %v976, %v978
    %v995 = vmul.f32 %v977, %v979
    %v996 = vmul.f32 %v994, %v980
    %v997 = vmul.f32 %v995, %v981
    %v998 = vmul.f32 %v996, 0.5
    %v999 = vmul.f32 %v997, 0.5
    %v1000 = vsub.f32 %v992, %v998
    %v1001 = vsub.f32 %v993, %v999
    %v1002 = vmul.f32 %v972, %v974
    %v1003 = vmul.f32 %v973, %v975
    %v1004 = vmul.f32 %v976, %v976
    %v1005 = vmul.f32 %v977, %v977
    %v1006 = vsub.f32 %v1002, %v1004
    %v1007 = vsub.f32 %v1003, %v1005
    %v1008 = vmul.f32 %v522, %v528
    %v1009 = vmul.f32 %v523, %v529
    %v1010 = vmul.f32 %v534, %v534
    %v1011 = vmul.f32 %v535, %v535
    %v1012 = vsub.f32 %v1008, %v1010
    %v1013 = vsub.f32 %v1009, %v1011
    %v1014 = vmul.f32 %v958, %v964
    %v1015 = vmul.f32 %v959, %v965
    %v1016 = vmul.f32 %v970, %v970
    %v1017 = vmul.f32 %v971, %v971
    %v1018 = vsub.f32 %v1014, %v1016
    %v1019 = vsub.f32 %v1015, %v1017
    %v1020 = vmul.f32 %v1012, %v1018
    %v1021 = vmul.f32 %v1013, %v1019
    %v1022 = vmax.f32 %v1020, 0.0
    %v1023 = vmax.f32 %v1021, 0.0
    %v1024 = vrsqrt.pop %v1022
    %v1025 = vmul.f32 %v1022, %v1024
    %vm1026 = vcmp.eq.f32.partialorder %v1022, inf
    %v1027 = vsel %vm1026, %v1022, %v1025
    %vm1028 = vcmp.eq.f32.partialorder %v1022, 0.0
    %v1029 = vand.u32 %v1022, 2147483648
    %v1030 = vsel %vm1028, %v1029, %v1027
    %v1031 = vrsqrt.pop %v1023
    %v1032 = vmul.f32 %v1023, %v1031
    %vm1033 = vcmp.eq.f32.partialorder %v1023, inf
    %v1034 = vsel %vm1033, %v1023, %v1032
    %vm1035 = vcmp.eq.f32.partialorder %v1023, 0.0
    %v1036 = vand.u32 %v1023, 2147483648
    %v1037 = vsel %vm1035, %v1036, %v1034
    %v1038 = vmul.f32 %v1030, 4.0
    %v1039 = vmul.f32 %v1037, 4.0
    %v1040 = vadd.f32 %v1038, 0.001
    %v1041 = vadd.f32 %v1039, 0.001
    %v1042 = vrcp.pop %v1040
    %v1043 = vmul.f32 %v1006, %v1042
    %v1044 = vrcp.pop %v1041
    %v1045 = vmul.f32 %v1007, %v1044
    %v1046 = vlog2.pop %v1043
    %v1047 = vmul.f32 %v1046, 0.6931472
    %v1048 = vlog2.pop %v1045
    %v1049 = vmul.f32 %v1048, 0.6931472
    %v1050 = vmul.f32 %v1047, 0.5
    %v1051 = vmul.f32 %v1049, 0.5
    %v1052 = vrcp.pop %v1006
    %v1053 = vmul.f32 %v1000, %v1052
    %v1054 = vrcp.pop %v1007
    %v1055 = vmul.f32 %v1001, %v1054
    %v1056 = vadd.f32 %v1053, %v1050
    %v1057 = vadd.f32 %v1055, %v1051
    %v1058 = vmax.f32 %v1056, 0.001
    %v1059 = vmax.f32 %v1057, 0.001
    %v1060 = vmin.f32 %v1058, 100.0
    %v1061 = vmin.f32 %v1059, 100.0
    %v1062 = vsub.f32 0.0, %v1060
    %v1063 = vsub.f32 0.0, %v1061
    %v1064 = vmul.f32 %v1062, 1.442695
    %v1065 = vpow.pop %v1064
    %v1066 = vmul.f32 %v1063, 1.442695
    %v1067 = vpow.pop %v1066
    %v1068 = vsub.f32 1.0, %v1065
    %v1069 = vsub.f32 1.0, %v1067
    %v1070 = vadd.f32 %v1068, 0.001
    %v1071 = vadd.f32 %v1069, 0.001
    %v1072 = vrsqrt.pop %v1070
    %v1073 = vmul.f32 %v1070, %v1072
    %vm1074 = vcmp.eq.f32.partialorder %v1070, inf
    %v1075 = vsel %vm1074, %v1070, %v1073
    %vm1076 = vcmp.eq.f32.partialorder %v1070, 0.0
    %v1077 = vand.u32 %v1070, 2147483648
    %v1078 = vsel %vm1076, %v1077, %v1075
    %v1079 = vrsqrt.pop %v1071
    %v1080 = vmul.f32 %v1071, %v1079
    %vm1081 = vcmp.eq.f32.partialorder %v1071, inf
    %v1082 = vsel %vm1081, %v1071, %v1080
    %vm1083 = vcmp.eq.f32.partialorder %v1071, 0.0
    %v1084 = vand.u32 %v1071, 2147483648
    %v1085 = vsel %vm1083, %v1084, %v1082
    %v1086 = vld [vmem:[#allocation7] sm:$0xff]
    %v1087 = vld [vmem:[#allocation7 + $0x8] sm:$0xff]
    %v1088 = vmul.f32 %v1078, %v1086
    %v1089 = vmul.f32 %v1085, %v1087
    %v1090 = vadd.f32 %v1088, %v1089
    %1091 = vst [vmem:[#allocation8] sm:$0xff] %v1090
    // Predicated region
    $region26: #{tpu_custom_call.1} parent=1 // pred_check
      _
    $region27: #{tpu_custom_call.1} parent=1 // pred_check_branch
      %1093 = sbr.rel (0) target = $region29
    $region28: #{tpu_custom_call.1} parent=1 // pred_region
      %s1095 = ssub.s32 128, 128
      %1096 = vsyncadd [#allocation4], %s1095
      %s1098 = sshll.u32 [#allocation8], 4
      %s1099 = int_to_ptr.vmem [resolvable:$true] %s1098
      %1101 = dma.vmem_to_hbm [thread:$0]  %s1099, 128, %s3, [#allocation4]
    $region29: #{tpu_custom_call.1} parent=1 // pred_fallthru
      _
    // Predicated region
    $region30: #{tpu_custom_call.1} parent=1 // pred_check
      _
    $region31: #{tpu_custom_call.1} parent=1 // pred_check_branch
      %1103 = sbr.rel (0) target = $region33
    $region32: #{tpu_custom_call.1} parent=1 // pred_region
      %1104 = dma.done [#allocation4], 128
    $region33: #{tpu_custom_call.1} parent=1 // pred_fallthru
      _
    %1105 = vsyncpa [#allocation3], 1
    %1106 = vsyncpa [#allocation6], 1
    %1107 = vsyncpa [#allocation4], 1

</llo_original>
